<compile_context>
chip_gen: v6e
topology: v6e:2x2x1
jax: 0.10.0
libtpu: 0.0.40
codegen_flags: <defaults>
</compile_context>

<pallas_src>
import functools

import jax
import jax.numpy as jnp
from jax.experimental import pallas as pl
from jax.experimental.pallas import tpu as pltpu


_TARGET_TILE_BYTES = 8 * 1024 * 1024   # ~8 MiB input tile (double-buffered)
_VMEM_LIMIT_BYTES = 32 * 1024 * 1024   # explicit scoped-VMEM cap (v5e..v7x safe)


def _sum_rows_kernel(sim_ref, out_ref, *, inv_qc):
    """General path: sim_ref [TR, C] -> out_ref [1, TR] (lane-dense)."""
    total = jnp.sum(sim_ref[...], axis=-1, dtype=jnp.float32)        # [TR]
    out_ref[...] = (total * inv_qc).astype(out_ref.dtype)[None, :]


def _packed_sum_rows_kernel(sim_ref, out_ref, *, seg_count, seg_width, inv_qc):
    """Packed path: each 128-lane row of sim_ref [TR, 128] holds `seg_count`
    original rows of width `seg_width`; out_ref [seg_count, TR] receives one
    lane-dense row of per-(q, s) results per segment."""
    x = sim_ref[...].astype(jnp.float32)                             # [TR, 128]
    lane = jax.lax.broadcasted_iota(jnp.int32, (1, x.shape[-1]), 1)  # [1, 128]
    for s in range(seg_count):                                       # static unroll
        sel = (lane >= s * seg_width) & (lane < (s + 1) * seg_width)
        seg_sum = jnp.sum(jnp.where(sel, x, 0.0), axis=-1)           # [TR] f32
        out_ref[pl.ds(s, 1), :] = (seg_sum * inv_qc).astype(out_ref.dtype)[None, :]


def _choose_tile_rows(num_rows, row_bytes, target_tile_bytes):
    """Rows per tile: ~target_tile_bytes of input, lane/sublane friendly."""
    rows = max(8, target_tile_bytes // max(row_bytes, 1))
    if rows >= num_rows:
        return int(num_rows)            # single full-extent block
    if rows >= 128:
        rows = (rows // 128) * 128      # lane-dense [1, TR] output stores
    else:
        rows = (rows // 8) * 8          # sublane multiple
    return max(int(rows), 8)


def _normalize_tile_rows(requested, num_rows):
    requested = int(requested)
    if requested >= num_rows:
        return int(num_rows)
    return max((requested // 8) * 8, min(8, num_rows))


def mean_matching(similarity: jax.Array, *, tile_rows=None,
                  target_tile_bytes=_TARGET_TILE_BYTES,
                  vmem_limit_bytes=_VMEM_LIMIT_BYTES) -> jax.Array:
    """Video-to-video similarity from the frame-to-frame similarity matrix.

    similarity: [Q, S, QC, SC] -> returns [Q, S] (same dtype as the input).
    """
    Q, S, QC, SC = similarity.shape
    R, C = Q * S, QC * SC
    out_dtype = similarity.dtype
    itemsize = jnp.dtype(similarity.dtype).itemsize
    inv_qc = 1.0 / QC

    compiler_params = pltpu.CompilerParams(
        dimension_semantics=("parallel",),
        vmem_limit_bytes=vmem_limit_bytes,
    )
    cost = pl.CostEstimate(
        flops=R * C + R,
        transcendentals=0,
        bytes_accessed=R * C * itemsize + R * jnp.dtype(out_dtype).itemsize,
    )

    # ---- Packed path: C divides 128 -> pack g rows per 128-lane row. -------
    pack = (128 // C) if (C < 128 and 128 % C == 0) else 1
    if pack > 1 and R % pack == 0:
        Rp = R // pack
        sim2d = similarity.reshape(Rp, pack * C)        # free contiguous collapse
        if tile_rows is not None:
            tr = _normalize_tile_rows(tile_rows, Rp)
        else:
            tr = _choose_tile_rows(Rp, pack * C * itemsize, target_tile_bytes)
        num_tiles = pl.cdiv(Rp, tr)

        kernel = functools.partial(_packed_sum_rows_kernel,
                                   seg_count=pack, seg_width=C, inv_qc=inv_qc)
        out = pl.pallas_call(
            kernel,
            out_shape=jax.ShapeDtypeStruct((pack, num_tiles * tr), out_dtype),
            grid=(num_tiles,),
            in_specs=[pl.BlockSpec((tr, pack * C), lambda i: (i, 0))],
            out_specs=pl.BlockSpec((pack, tr), lambda i: (0, i)),
            compiler_params=compiler_params,
            cost_estimate=cost,
        )(sim2d)
        # out[s, p] is the result for original row p * pack + s.
        return out.T.reshape(-1)[:R].reshape(Q, S)

    # ---- General path: reduction width C on the lane axis. -----------------
    sim2d = similarity.reshape(R, C)                     # free contiguous collapse
    if tile_rows is not None:
        tr = _normalize_tile_rows(tile_rows, R)
    else:
        tr = _choose_tile_rows(R, C * itemsize, target_tile_bytes)
    num_tiles = pl.cdiv(R, tr)

    kernel = functools.partial(_sum_rows_kernel, inv_qc=inv_qc)
    out = pl.pallas_call(
        kernel,
        out_shape=jax.ShapeDtypeStruct((num_tiles, tr), out_dtype),
        grid=(num_tiles,),
        in_specs=[pl.BlockSpec((tr, C), lambda i: (i, 0))],
        out_specs=pl.BlockSpec((1, tr), lambda i: (i, 0)),
        compiler_params=compiler_params,
        cost_estimate=cost,
    )(sim2d)
    return out.reshape(-1)[:R].reshape(Q, S)


if __name__ == "__main__":
    def _ref(sim):
        return jnp.mean(jnp.sum(sim.astype(jnp.float32), axis=-1), axis=-1)

    key = jax.random.PRNGKey(0)
    k0, k1, k2, k3 = jax.random.split(key, 4)

    # 1) Canonical shape: 2 queries x 4 supports x 8x8 clips.
    #    C = 64 -> packed path (2 rows per 128-lane row), single tile.
    sim0 = jax.random.normal(k0, (2, 4, 8, 8), dtype=jnp.float32)
    out0 = jax.block_until_ready(mean_matching(sim0))
    assert out0.shape == (2, 4)
    assert jnp.allclose(out0, _ref(sim0), atol=1e-5, rtol=1e-5), "mismatch (packed)"

    # 2) General path (C = 4*32 = 128, already lane-dense), multi-tile grid
    #    with a partial final tile (R = 18, tile_rows = 8 -> overhang of 6 rows,
    #    no host-side pad).
    sim1 = jax.random.normal(k1, (3, 6, 4, 32), dtype=jnp.float32)
    out1 = jax.block_until_ready(mean_matching(sim1, tile_rows=8))
    assert out1.shape == (3, 6)
    assert jnp.allclose(out1, _ref(sim1), atol=1e-5, rtol=1e-5), "mismatch (general)"

    # 3) Packed path with a multi-tile grid and a partial final tile
    #    (R = 30 -> 15 packed rows, tile_rows = 8 -> overhang of 1 packed row).
    sim2 = jax.random.normal(k2, (5, 6, 8, 8), dtype=jnp.float32)
    out2 = jax.block_until_ready(mean_matching(sim2, tile_rows=8))
    assert out2.shape == (5, 6)
    assert jnp.allclose(out2, _ref(sim2), atol=1e-5, rtol=1e-5), "mismatch (packed tiled)"

    # 4) General path with a non-aligned reduction width (C = 80) and a row
    #    count that is not a sublane multiple (R = 6, single full-extent block).
    sim3 = jax.random.normal(k3, (2, 3, 5, 16), dtype=jnp.float32)
    out3 = jax.block_until_ready(mean_matching(sim3))
    assert out3.shape == (2, 3)
    assert jnp.allclose(out3, _ref(sim3), atol=1e-5, rtol=1e-5), "mismatch (odd shape)"

    # 5) bf16 input (halves HBM read bytes for this read-bound op); f32 accumulate.
    sim4 = sim0.astype(jnp.bfloat16)
    out4 = jax.block_until_ready(mean_matching(sim4))
    assert out4.dtype == jnp.bfloat16
    assert jnp.allclose(out4.astype(jnp.float32),
                        _ref(sim4.astype(jnp.float32)),
                        atol=0.1, rtol=0.05), "mismatch (bf16)"

    print("KERNEL_OK")
</pallas_src>

<mosaic_0001>
module attributes {stable_mosaic.version = 11 : i64} {
  func.func @_packed_sum_rows_kernel(%arg0: i32, %arg1: memref<4x128xf32, #tpu.memory_space<vmem>>, %arg2: memref<2x4xf32, #tpu.memory_space<vmem>>) attributes {dimension_semantics = [#tpu.dimension_semantics<parallel>], iteration_bounds = array<i64: 1>, scalar_prefetch = 0 : i64, scratch_operands = 0 : i64, tpu.core_type = #tpu.core_type<tc>, window_params = [{transform_indices = @transform_0, window_bounds = array<i64: 4, 128>}, {transform_indices = @transform_1, window_bounds = array<i64: 2, 4>}]} {
    %c0 = arith.constant 0 : index
    %c0_0 = arith.constant 0 : index
    %0 = vector.load %arg1[%c0, %c0_0] : memref<4x128xf32, #tpu.memory_space<vmem>>, vector<4x128xf32>
    %1 = tpu.iota {dimensions = array<i32: 1>} : vector<1x128xi32>
    %c0_i32 = arith.constant 0 : i32
    %2 = vector.broadcast %c0_i32 : i32 to vector<1x128xi32>
    %3 = arith.cmpi sge, %1, %2 : vector<1x128xi32>
    %c64_i32 = arith.constant 64 : i32
    %4 = vector.broadcast %c64_i32 : i32 to vector<1x128xi32>
    %5 = arith.cmpi slt, %1, %4 : vector<1x128xi32>
    %6 = arith.andi %3, %5 : vector<1x128xi1>
    %cst = arith.constant 0.000000e+00 : f32
    %7 = vector.shape_cast %6 : vector<1x128xi1> to vector<1x128xi1>
    %8 = vector.broadcast %7 : vector<1x128xi1> to vector<4x128xi1>
    %9 = vector.broadcast %cst : f32 to vector<4x128xf32>
    %10 = arith.select %8, %0, %9 : vector<4x128xi1>, vector<4x128xf32>
    %cst_1 = arith.constant dense<0.000000e+00> : vector<4xf32>
    %11 = vector.multi_reduction <add>, %10, %cst_1 [1] : vector<4x128xf32> to vector<4xf32>
    %cst_2 = arith.constant 1.250000e-01 : f32
    %12 = vector.broadcast %cst_2 : f32 to vector<4xf32>
    %13 = arith.mulf %11, %12 : vector<4xf32>
    %14 = vector.shape_cast %13 : vector<4xf32> to vector<1x4xf32>
    %c0_3 = arith.constant 0 : index
    %c0_4 = arith.constant 0 : index
    %15 = vector.load %arg2[%c0_3, %c0_4] : memref<2x4xf32, #tpu.memory_space<vmem>>, vector<1x4xf32>
    tpu.vector_store %arg2[%c0_3, %c0_4], %14 {strides = array<i32>} : memref<2x4xf32, #tpu.memory_space<vmem>>, vector<1x4xf32>,
    %c64_i32_5 = arith.constant 64 : i32
    %16 = vector.broadcast %c64_i32_5 : i32 to vector<1x128xi32>
    %17 = arith.cmpi sge, %1, %16 : vector<1x128xi32>
    %c128_i32 = arith.constant 128 : i32
    %18 = vector.broadcast %c128_i32 : i32 to vector<1x128xi32>
    %19 = arith.cmpi slt, %1, %18 : vector<1x128xi32>
    %20 = arith.andi %17, %19 : vector<1x128xi1>
    %cst_6 = arith.constant 0.000000e+00 : f32
    %21 = vector.shape_cast %20 : vector<1x128xi1> to vector<1x128xi1>
    %22 = vector.broadcast %21 : vector<1x128xi1> to vector<4x128xi1>
    %23 = vector.broadcast %cst_6 : f32 to vector<4x128xf32>
    %24 = arith.select %22, %0, %23 : vector<4x128xi1>, vector<4x128xf32>
    %cst_7 = arith.constant dense<0.000000e+00> : vector<4xf32>
    %25 = vector.multi_reduction <add>, %24, %cst_7 [1] : vector<4x128xf32> to vector<4xf32>
    %cst_8 = arith.constant 1.250000e-01 : f32
    %26 = vector.broadcast %cst_8 : f32 to vector<4xf32>
    %27 = arith.mulf %25, %26 : vector<4xf32>
    %28 = vector.shape_cast %27 : vector<4xf32> to vector<1x4xf32>
    %c1 = arith.constant 1 : index
    %c0_9 = arith.constant 0 : index
    %29 = vector.load %arg2[%c1, %c0_9] : memref<2x4xf32, #tpu.memory_space<vmem>>, vector<1x4xf32>
    tpu.vector_store %arg2[%c1, %c0_9], %28 {strides = array<i32>} : memref<2x4xf32, #tpu.memory_space<vmem>>, vector<1x4xf32>,
    return
  }
  func.func @transform_0(%arg0: i32) -> (i32, i32) {
    %c0_i32 = arith.constant 0 : i32
    %c0_i32_0 = arith.constant 0 : i32
    return %arg0, %c0_i32 : i32, i32
  }
  func.func @transform_1(%arg0: i32) -> (i32, i32) {
    %c0_i32 = arith.constant 0 : i32
    %c0_i32_0 = arith.constant 0 : i32
    return %c0_i32, %arg0 : i32, i32
  }
}

</mosaic_0001>

<llo_original>
// kernel: tpu_custom_call.1
$region0: #{tpu_custom_call.1}
  #allocation0 [shape = 'u32[]', space=smem, size = 0x4, offset = 0x4, fixed_abs, tag = 'smem constant byte address 0x4 - core index']
  #allocation1 [shape = 'u32[144,128]{1,0:T(1,128)}', space=vmem, size = 0x12000, scoped, tag = 'internal scratch']
  %s0 = inlined_call_operand.hbm [shape: f32[4,128], index: 0, kind: input, shape index: {}]
  %s1 = inlined_call_operand.hbm [shape: f32[2,4], index: 1, kind: output, shape index: {}]
  %s2 = sld [smem:[#allocation0]]
  $region18: #{tpu_custom_call.1} parent=0
    _
  %s4 = ssub.s32 1, %s2
  %s5 = scalar_select 0, %s4, %s2
  $region1: #{tpu_custom_call.1} parent=0
    #allocation2 [shape = 'u8[2048]{0}', space=vmem, size = 0x800, scoped, tag = 'input window, operand 0, single buffered']
    #allocation3 [shape = 's32[1]{0}', space=sflag, size = 0x4, scoped, tag = 'scoped memory for tpu_custom_call.1']
    #allocation4 [shape = 's32[1]{0}', space=sflag, size = 0x4, scoped, tag = 'scoped memory for tpu_custom_call.1']
    #allocation5 [shape = 'u8[1024]{0}', space=vmem, size = 0x400, scoped, tag = 'output window, operand 0, single buffered']
    %6 = vsyncpa [#allocation3], 0
    %7 = vsyncpa [#allocation4], 0
    // Predicated region
    $region2: #{tpu_custom_call.1} parent=1 // pred_check
      _
    $region3: #{tpu_custom_call.1} parent=1 // pred_check_branch
      %9 = sbr.rel (0) target = $region5
    $region4: #{tpu_custom_call.1} parent=1 // pred_region
      %s11 = ssub.s32 64, 64
      %12 = vsyncadd [#allocation3], %s11
      %s14 = sshll.u32 [#allocation2], 4
      %s15 = int_to_ptr.vmem [resolvable:$true] %s14
      %17 = dma.hbm_to_vmem [thread:$0]  %s0, 64, %s15, [#allocation3]
    $region5: #{tpu_custom_call.1} parent=1 // pred_fallthru
      _
    // Predicated region
    $region6: #{tpu_custom_call.1} parent=1 // pred_check
      _
    $region7: #{tpu_custom_call.1} parent=1 // pred_check_branch
      %19 = sbr.rel (0) target = $region9
    $region8: #{tpu_custom_call.1} parent=1 // pred_region
      %20 = dma.done [#allocation3], 64
    $region9: #{tpu_custom_call.1} parent=1 // pred_fallthru
      _
    %v21 = vld [vmem:[#allocation2] sm:$0xf]
    %v22 = vlaneseq
    %v23 = vand.u32 %v22, 127
    %vm24 = vcmp.ge.s32.totalorder %v23, 0
    %vm25 = vcmp.lt.s32.totalorder %v23, 64
    %vm26 = vmand %vm24, %vm25
    %v27 = vsel %vm26, 1, 0
    %vm28 = vcmp.eq.s32.totalorder %v27, 1
    %v29 = vsel %vm28, %v21, 0.0
    %vm30 = vcmask 1043456
    %v31 = vsel %vm30, %v29, 0.0
    %32 = vadd.xlane.f32.xlu0 %v31
    %v33 = vpop.xlane.xlu0 %32
    %v34 = vmul.f32 %v33, 0.125
    %v36 = vlaneseq
    %v37 = vshrl.u32 %v36, 7
    %v38 = vsub.s32 %v23, %v37
    %v39 = vrot.slane %v34, %v38
    %vm41 = vcmask 24576
    %42 = vst.msk [vmem:[#allocation5] sm:$0x1] %vm41, %v39
    %vm43 = vcmp.ge.s32.totalorder %v23, 64
    %vm44 = vcmp.lt.s32.totalorder %v23, 128
    %vm45 = vmand %vm43, %vm44
    %v46 = vsel %vm45, 1, 0
    %vm47 = vcmp.eq.s32.totalorder %v46, 1
    %v48 = vsel %vm47, %v21, 0.0
    %v49 = vsel %vm30, %v48, 0.0
    %50 = vadd.xlane.f32.xlu0 %v49
    %v51 = vpop.xlane.xlu0 %50
    %v52 = vmul.f32 %v51, 0.125
    %v54 = vlaneseq
    %v55 = vshrl.u32 %v54, 7
    %v56 = vsub.s32 %v23, %v55
    %v57 = vrot.slane %v52, %v56
    %59 = vst.msk [vmem:[#allocation5 + $0x1] sm:$0x1] %vm41, %v57
    // Predicated region
    $region10: #{tpu_custom_call.1} parent=1 // pred_check
      _
    $region11: #{tpu_custom_call.1} parent=1 // pred_check_branch
      %61 = sbr.rel (0) target = $region13
    $region12: #{tpu_custom_call.1} parent=1 // pred_region
      %s63 = ssub.s32 32, 32
      %64 = vsyncadd [#allocation4], %s63
      %s66 = sshll.u32 [#allocation5], 4
      %s67 = int_to_ptr.vmem [resolvable:$true] %s66
      %69 = dma.vmem_to_hbm [thread:$0]  %s67, 32, %s1, [#allocation4]
    $region13: #{tpu_custom_call.1} parent=1 // pred_fallthru
      _
    // Predicated region
    $region14: #{tpu_custom_call.1} parent=1 // pred_check
      _
    $region15: #{tpu_custom_call.1} parent=1 // pred_check_branch
      %71 = sbr.rel (0) target = $region17
    $region16: #{tpu_custom_call.1} parent=1 // pred_region
      %72 = dma.done [#allocation4], 32
    $region17: #{tpu_custom_call.1} parent=1 // pred_fallthru
      _
    %73 = vsyncpa [#allocation3], 1
    %74 = vsyncpa [#allocation4], 1

</llo_original>
